<compile_context>
chip_gen: v5e
topology: v5e:2x2
jax: 0.10.0
libtpu: 0.0.40
codegen_flags: <defaults>
</compile_context>

<pallas_src>
import jax
import jax.numpy as jnp
from jax.experimental import pallas as pl
from jax.experimental.pallas import tpu as pltpu

_SUBLANE = 8                 # f32 sublane width (row-tile alignment)
_DEFAULT_TILE_ROWS = 8192    # ~256 KiB of f32 rays (d_in=8) per grid step


def _round_up(x, m):
    return ((x + m - 1) // m) * m


def _forward_tile_kernel(rays_ref, w1_ref, b1_ref, w2_ref, b2_ref, out_ref):
    """One row-tile of rays: out = relu(rays @ w1 + b1) @ w2 + b2.

    Streamed operands (rays, out) use full-dim last-axis blocks (no padding);
    weights/biases are small, VMEM-resident, full-array blocks.  Matmuls
    accumulate in f32 via preferred_element_type.
    """
    x = rays_ref[...]                                              # (tile, d_in)
    h = jnp.dot(x, w1_ref[...], preferred_element_type=jnp.float32)
    h = jnp.maximum(h + b1_ref[...], 0.0)                          # bias + ReLU in f32
    o = jnp.dot(h.astype(w2_ref.dtype), w2_ref[...],
                preferred_element_type=jnp.float32)
    out_ref[...] = (o + b2_ref[...]).astype(out_ref.dtype)


def base_model_forward(rays, params, *, ray_chunk, training=False,
                       tile_rows=None, compute_dtype=None):
    """Mirrors BaseModel.forward.

    training=True  -> forward_(rays)
    training=False -> chunk_batch(forward_, ray_chunk, rays)

    Both paths are numerically identical, so the kernel row tile is an
    implementation detail decoupled from `ray_chunk`: one large row-tiled
    "parallel" grid serves both (this IS chunk_batch, executed on-chip).
    """
    del training, ray_chunk   # identical math; chunking is the grid itself
    out_dtype = rays.dtype    # output dtype follows the caller's rays dtype

    w1, b1, w2, b2 = params["w1"], params["b1"], params["w2"], params["b2"]
    if compute_dtype is not None:
        # Optional bf16 streaming: halves HBM traffic on this mem-bound kernel.
        rays = rays.astype(compute_dtype)
        w1, b1 = w1.astype(compute_dtype), b1.astype(compute_dtype)
        w2, b2 = w2.astype(compute_dtype), b2.astype(compute_dtype)

    n, d_in = rays.shape
    hidden = w1.shape[1]
    d_out = w2.shape[1]

    # ---- row tiling: large tiles, sublane-aligned, grid kept >= 2 steps ----
    if tile_rows is None:
        # Cap at half the batch (rounded to sublane) so v7x's 2 TensorCores
        # both get work; never let a medium batch collapse to grid=(1,).
        half = _round_up(pl.cdiv(n, 2), _SUBLANE)
        tile_rows = min(_DEFAULT_TILE_ROWS, half)
    tile_rows = max(_SUBLANE, _round_up(tile_rows, _SUBLANE))

    grid = (pl.cdiv(n, tile_rows),)   # ragged last block handled by Pallas

    out = pl.pallas_call(
        _forward_tile_kernel,
        out_shape=jax.ShapeDtypeStruct((n, d_out), out_dtype),
        grid=grid,
        in_specs=[
            # one row tile of rays per grid step; last dim = full array dim
            pl.BlockSpec((tile_rows, d_in), lambda i: (i, 0)),
            # weights / biases: constant index -> VMEM-resident across steps
            pl.BlockSpec((d_in, hidden), lambda i: (0, 0)),
            pl.BlockSpec((1, hidden), lambda i: (0, 0)),
            pl.BlockSpec((hidden, d_out), lambda i: (0, 0)),
            pl.BlockSpec((1, d_out), lambda i: (0, 0)),
        ],
        out_specs=pl.BlockSpec((tile_rows, d_out), lambda i: (i, 0)),
        compiler_params=pltpu.CompilerParams(
            # disjoint output blocks, no accumulator -> shard across TCs (v7x)
            dimension_semantics=("parallel",),
        ),
    )(rays, w1, b1, w2, b2)

    # BaseModel.forward returns {**out}
    return {"out": out}


def init_params(key, d_in, hidden, d_out):
    # Raw (unpadded) params; nothing is materialized per forward call.
    k1, k2 = jax.random.split(key)
    return {
        "w1": jax.random.normal(k1, (d_in, hidden), jnp.float32) * 0.1,
        "b1": jnp.zeros((1, hidden), jnp.float32),
        "w2": jax.random.normal(k2, (hidden, d_out), jnp.float32) * 0.1,
        "b2": jnp.zeros((1, d_out), jnp.float32),
    }


def _reference_forward(rays, params):
    h = jnp.maximum(rays @ params["w1"] + params["b1"], 0.0)
    return h @ params["w2"] + params["b2"]


if __name__ == "__main__":
    key = jax.random.PRNGKey(0)
    k_rays, k_params = jax.random.split(key)

    # Small, module-consistent shapes.  N is deliberately not a multiple of
    # the row tile to exercise the ragged last-block path (67 = 40 + 27).
    N, D_IN, HIDDEN, D_OUT = 67, 8, 32, 4
    RAY_CHUNK = 16  # config.ray_chunk (decoupled from the kernel tile)

    rays = jax.random.normal(k_rays, (N, D_IN), jnp.float32)
    params = init_params(k_params, D_IN, HIDDEN, D_OUT)

    # eval path (chunk_batch semantics) and training path (whole-batch forward_)
    out_eval = base_model_forward(rays, params, ray_chunk=RAY_CHUNK, training=False)
    out_train = base_model_forward(rays, params, ray_chunk=RAY_CHUNK, training=True)

    jax.block_until_ready(out_eval["out"])
    jax.block_until_ready(out_train["out"])

    ref = _reference_forward(rays, params)

    assert out_eval["out"].shape == (N, D_OUT)
    assert jnp.allclose(out_eval["out"], out_train["out"], atol=1e-5)
    assert jnp.allclose(out_eval["out"], ref, atol=1e-4, rtol=1e-4)

    print("KERNEL_OK")
</pallas_src>

<mosaic_0001>
module attributes {stable_mosaic.version = 11 : i64} {
  func.func @_forward_tile_kernel(%arg0: i32, %arg1: memref<40x8xf32, #tpu.memory_space<vmem>>, %arg2: memref<8x32xf32, #tpu.memory_space<vmem>>, %arg3: memref<1x32xf32, #tpu.memory_space<vmem>>, %arg4: memref<32x4xf32, #tpu.memory_space<vmem>>, %arg5: memref<1x4xf32, #tpu.memory_space<vmem>>, %arg6: memref<40x4xf32, #tpu.memory_space<vmem>>) attributes {dimension_semantics = [#tpu.dimension_semantics<parallel>], iteration_bounds = array<i64: 2>, scalar_prefetch = 0 : i64, scratch_operands = 0 : i64, tpu.core_type = #tpu.core_type<tc>, window_params = [{transform_indices = @transform_0, window_bounds = array<i64: 40, 8>}, {pipeline_mode = #tpu.pipeline_mode<synchronous>, transform_indices = @transform_1, window_bounds = array<i64: 8, 32>}, {pipeline_mode = #tpu.pipeline_mode<synchronous>, transform_indices = @transform_2, window_bounds = array<i64: 1, 32>}, {pipeline_mode = #tpu.pipeline_mode<synchronous>, transform_indices = @transform_3, window_bounds = array<i64: 32, 4>}, {pipeline_mode = #tpu.pipeline_mode<synchronous>, transform_indices = @transform_4, window_bounds = array<i64: 1, 4>}, {transform_indices = @transform_5, window_bounds = array<i64: 40, 4>}]} {
    %c0 = arith.constant 0 : index
    %c0_0 = arith.constant 0 : index
    %0 = vector.load %arg1[%c0, %c0_0] : memref<40x8xf32, #tpu.memory_space<vmem>>, vector<40x8xf32>
    %c0_1 = arith.constant 0 : index
    %c0_2 = arith.constant 0 : index
    %1 = vector.load %arg2[%c0_1, %c0_2] : memref<8x32xf32, #tpu.memory_space<vmem>>, vector<8x32xf32>
    %cst = arith.constant dense<0.000000e+00> : vector<40x32xf32>
    %2 = tpu.matmul %0, %1, %cst {dimension_numbers = #tpu.dot_dimension_numbers<[1], [0], [0], [1], [0, 0, 1, 1], [], []>} : vector<40x8xf32>, vector<8x32xf32>, vector<40x32xf32> -> vector<40x32xf32>
    %c0_3 = arith.constant 0 : index
    %c0_4 = arith.constant 0 : index
    %3 = vector.load %arg3[%c0_3, %c0_4] : memref<1x32xf32, #tpu.memory_space<vmem>>, vector<1x32xf32>
    %4 = vector.broadcast %3 : vector<1x32xf32> to vector<40x32xf32>
    %5 = arith.addf %2, %4 : vector<40x32xf32>
    %cst_5 = arith.constant 0.000000e+00 : f32
    %6 = vector.broadcast %cst_5 : f32 to vector<40x32xf32>
    %7 = arith.maximumf %5, %6 : vector<40x32xf32>
    %c0_6 = arith.constant 0 : index
    %c0_7 = arith.constant 0 : index
    %8 = vector.load %arg4[%c0_6, %c0_7] : memref<32x4xf32, #tpu.memory_space<vmem>>, vector<32x4xf32>
    %cst_8 = arith.constant dense<0.000000e+00> : vector<40x4xf32>
    %9 = tpu.matmul %7, %8, %cst_8 {dimension_numbers = #tpu.dot_dimension_numbers<[1], [0], [0], [1], [0, 0, 1, 1], [], []>} : vector<40x32xf32>, vector<32x4xf32>, vector<40x4xf32> -> vector<40x4xf32>
    %c0_9 = arith.constant 0 : index
    %c0_10 = arith.constant 0 : index
    %10 = vector.load %arg5[%c0_9, %c0_10] : memref<1x4xf32, #tpu.memory_space<vmem>>, vector<1x4xf32>
    %11 = vector.broadcast %10 : vector<1x4xf32> to vector<40x4xf32>
    %12 = arith.addf %9, %11 : vector<40x4xf32>
    %c0_11 = arith.constant 0 : index
    %c0_12 = arith.constant 0 : index
    %13 = vector.load %arg6[%c0_11, %c0_12] : memref<40x4xf32, #tpu.memory_space<vmem>>, vector<40x4xf32>
    tpu.vector_store %arg6[%c0_11, %c0_12], %12 {strides = array<i32>} : memref<40x4xf32, #tpu.memory_space<vmem>>, vector<40x4xf32>,
    return
  }
  func.func @transform_0(%arg0: i32) -> (i32, i32) {
    %c0_i32 = arith.constant 0 : i32
    %c0_i32_0 = arith.constant 0 : i32
    return %arg0, %c0_i32 : i32, i32
  }
  func.func @transform_1(%arg0: i32) -> (i32, i32) {
    %c0_i32 = arith.constant 0 : i32
    %c0_i32_0 = arith.constant 0 : i32
    %c0_i32_1 = arith.constant 0 : i32
    return %c0_i32, %c0_i32_0 : i32, i32
  }
  func.func @transform_2(%arg0: i32) -> (i32, i32) {
    %c0_i32 = arith.constant 0 : i32
    %c0_i32_0 = arith.constant 0 : i32
    %c0_i32_1 = arith.constant 0 : i32
    return %c0_i32, %c0_i32_0 : i32, i32
  }
  func.func @transform_3(%arg0: i32) -> (i32, i32) {
    %c0_i32 = arith.constant 0 : i32
    %c0_i32_0 = arith.constant 0 : i32
    %c0_i32_1 = arith.constant 0 : i32
    return %c0_i32, %c0_i32_0 : i32, i32
  }
  func.func @transform_4(%arg0: i32) -> (i32, i32) {
    %c0_i32 = arith.constant 0 : i32
    %c0_i32_0 = arith.constant 0 : i32
    %c0_i32_1 = arith.constant 0 : i32
    return %c0_i32, %c0_i32_0 : i32, i32
  }
  func.func @transform_5(%arg0: i32) -> (i32, i32) {
    %c0_i32 = arith.constant 0 : i32
    %c0_i32_0 = arith.constant 0 : i32
    return %arg0, %c0_i32 : i32, i32
  }
}

</mosaic_0001>

<llo_original>
// kernel: tpu_custom_call.1
$region0: #{tpu_custom_call.1}
  #allocation0 [shape = 'u32[]', space=smem, size = 0x4, offset = 0x4, fixed_abs, tag = 'smem constant byte address 0x4 - core index']
  #allocation1 [shape = 'u32[72,128]{1,0:T(1,128)}', space=vmem, size = 0x9000, scoped, tag = 'internal scratch']
  %s0 = inlined_call_operand.vmem [shape: f32[67,8], index: 0, kind: input, shape index: {}]
  %s1 = inlined_call_operand.vmem [shape: f32[8,32], index: 1, kind: input, shape index: {}]
  %s2 = inlined_call_operand.vmem [shape: f32[1,32], index: 2, kind: input, shape index: {}]
  %s3 = inlined_call_operand.vmem [shape: f32[32,4], index: 3, kind: input, shape index: {}]
  %s4 = inlined_call_operand.vmem [shape: f32[1,4], index: 4, kind: input, shape index: {}]
  %s5 = inlined_call_operand.vmem [shape: f32[67,4], index: 5, kind: output, shape index: {}]
  %s6 = sld [smem:[#allocation0]]
  $region101: #{tpu_custom_call.1} parent=0
    _
  %s8 = ssub.s32 1, %s6
  %s9 = scalar_select 0, %s8, %s6
  $region1: #{tpu_custom_call.1} parent=0
    #allocation2 [shape = 'u8[40960]{0}', space=vmem, size = 0xa000, scoped, tag = 'output window, operand 0']
    loop: start=0, step=1, limit=4
    $region2: #{tpu_custom_call.1} parent=1 // loop_pre_header
      _
    $region3: #{tpu_custom_call.1} parent=1 // loop_header
      %s11 = sphi 0, %s15
      %p12 = scmp.ge.s32.totalorder %s11, 4
      %s21 = sphi 0, %s23
      %s24 = sphi 0, %s21
      %s25 = sphi 0, %s24
      %s41 = sphi 0, %s25
      %s45 = sphi 0, %s45
      %s47 = sphi 0, %s45
      %s48 = sphi 0, %s47
      %s62 = sphi 0, %s48
      %s66 = sphi 0, %s66
      %s68 = sphi 0, %s66
      %s69 = sphi 0, %s68
      %s83 = sphi 0, %s69
      %s87 = sphi 0, %s87
      %s89 = sphi 0, %s87
      %s90 = sphi 0, %s89
      %s104 = sphi 0, %s90
      %s108 = sphi 0, %s108
      %s110 = sphi 0, %s108
      %s111 = sphi 0, %s110
      %s125 = sphi 0, %s111
      %s131 = sphi 0, %s133
      %s134 = sphi 0, %s131
      %s135 = sphi 0, %s134
      %s151 = sphi 0, %s135
    $region4: #{tpu_custom_call.1} parent=1 // loop_header_branch
      %14 = sbr.rel (%p12) target = $region8
    $region5: #{tpu_custom_call.1} parent=1 // loop_body
      %s16 = ssub.s32 %s11, 1
      %s17 = ssub.s32 %s11, 2
      %s18 = sadd.s32 %s11, 1
      %s19 = ssub.s32 %s11, %s18
      %p20 = scmp.eq.s32.totalorder %s19, 0
      %s22 = sadd.s32 %s21, 1
      %s23 = scalar_select %p20, %s21, %s22
      %p26 = pneg %p20
      %p27 = scmp.eq.s32.totalorder %s11, 1
      %p28 = por %p26, %p27
      %p29 = scmp.ne.s32.totalorder %s21, %s24
      %p30 = scmp.eq.s32.totalorder %s11, 0
      %p31 = por %p29, %p30
      %p32 = scmp.ne.s32.totalorder %s21, %s24
      %p33 = scmp.eq.s32.totalorder %s16, 1
      %p34 = por %p32, %p33
      %p35 = scmp.ne.s32.totalorder %s24, %s25
      %p36 = scmp.eq.s32.totalorder %s16, 0
      %p37 = por %p35, %p36
      %p38 = scmp.ne.s32.totalorder %s24, %s25
      %p39 = scmp.eq.s32.totalorder %s17, 1
      %p40 = por %p38, %p39
      %p42 = scmp.ne.s32.totalorder %s25, %s41
      %p43 = scmp.eq.s32.totalorder %s17, 0
      %p44 = por %p42, %p43
      %s46 = sadd.s32 %s45, 1
      %p49 = scmp.eq.s32.totalorder %s11, 1
      %p50 = scmp.ne.s32.totalorder %s45, %s47
      %p51 = scmp.eq.s32.totalorder %s11, 0
      %p52 = por %p50, %p51
      %p53 = scmp.ne.s32.totalorder %s45, %s47
      %p54 = scmp.eq.s32.totalorder %s16, 1
      %p55 = por %p53, %p54
      %p56 = scmp.ne.s32.totalorder %s47, %s48
      %p57 = scmp.eq.s32.totalorder %s16, 0
      %p58 = por %p56, %p57
      %p59 = scmp.ne.s32.totalorder %s47, %s48
      %p60 = scmp.eq.s32.totalorder %s17, 1
      %p61 = por %p59, %p60
      %p63 = scmp.ne.s32.totalorder %s48, %s62
      %p64 = scmp.eq.s32.totalorder %s17, 0
      %p65 = por %p63, %p64
      %s67 = sadd.s32 %s66, 1
      %p70 = scmp.eq.s32.totalorder %s11, 1
      %p71 = scmp.ne.s32.totalorder %s66, %s68
      %p72 = scmp.eq.s32.totalorder %s11, 0
      %p73 = por %p71, %p72
      %p74 = scmp.ne.s32.totalorder %s66, %s68
      %p75 = scmp.eq.s32.totalorder %s16, 1
      %p76 = por %p74, %p75
      %p77 = scmp.ne.s32.totalorder %s68, %s69
      %p78 = scmp.eq.s32.totalorder %s16, 0
      %p79 = por %p77, %p78
      %p80 = scmp.ne.s32.totalorder %s68, %s69
      %p81 = scmp.eq.s32.totalorder %s17, 1
      %p82 = por %p80, %p81
      %p84 = scmp.ne.s32.totalorder %s69, %s83
      %p85 = scmp.eq.s32.totalorder %s17, 0
      %p86 = por %p84, %p85
      %s88 = sadd.s32 %s87, 1
      %p91 = scmp.eq.s32.totalorder %s11, 1
      %p92 = scmp.ne.s32.totalorder %s87, %s89
      %p93 = scmp.eq.s32.totalorder %s11, 0
      %p94 = por %p92, %p93
      %p95 = scmp.ne.s32.totalorder %s87, %s89
      %p96 = scmp.eq.s32.totalorder %s16, 1
      %p97 = por %p95, %p96
      %p98 = scmp.ne.s32.totalorder %s89, %s90
      %p99 = scmp.eq.s32.totalorder %s16, 0
      %p100 = por %p98, %p99
      %p101 = scmp.ne.s32.totalorder %s89, %s90
      %p102 = scmp.eq.s32.totalorder %s17, 1
      %p103 = por %p101, %p102
      %p105 = scmp.ne.s32.totalorder %s90, %s104
      %p106 = scmp.eq.s32.totalorder %s17, 0
      %p107 = por %p105, %p106
      %s109 = sadd.s32 %s108, 1
      %p112 = scmp.eq.s32.totalorder %s11, 1
      %p113 = scmp.ne.s32.totalorder %s108, %s110
      %p114 = scmp.eq.s32.totalorder %s11, 0
      %p115 = por %p113, %p114
      %p116 = scmp.ne.s32.totalorder %s108, %s110
      %p117 = scmp.eq.s32.totalorder %s16, 1
      %p118 = por %p116, %p117
      %p119 = scmp.ne.s32.totalorder %s110, %s111
      %p120 = scmp.eq.s32.totalorder %s16, 0
      %p121 = por %p119, %p120
      %p122 = scmp.ne.s32.totalorder %s110, %s111
      %p123 = scmp.eq.s32.totalorder %s17, 1
      %p124 = por %p122, %p123
      %p126 = scmp.ne.s32.totalorder %s111, %s125
      %p127 = scmp.eq.s32.totalorder %s17, 0
      %p128 = por %p126, %p127
      %s129 = ssub.s32 %s11, %s18
      %p130 = scmp.eq.s32.totalorder %s129, 0
      %s132 = sadd.s32 %s131, 1
      %s133 = scalar_select %p130, %s131, %s132
      %p136 = pneg %p130
      %p137 = scmp.eq.s32.totalorder %s11, 1
      %p138 = por %p136, %p137
      %p139 = scmp.ne.s32.totalorder %s131, %s134
      %p140 = scmp.eq.s32.totalorder %s11, 0
      %p141 = por %p139, %p140
      %p142 = scmp.ne.s32.totalorder %s131, %s134
      %p143 = scmp.eq.s32.totalorder %s16, 1
      %p144 = por %p142, %p143
      %p145 = scmp.ne.s32.totalorder %s134, %s135
      %p146 = scmp.eq.s32.totalorder %s16, 0
      %p147 = por %p145, %p146
      %p148 = scmp.ne.s32.totalorder %s134, %s135
      %p149 = scmp.eq.s32.totalorder %s17, 1
      %p150 = por %p148, %p149
      %p152 = scmp.ne.s32.totalorder %s135, %s151
      %p153 = scmp.eq.s32.totalorder %s17, 0
      %p154 = por %p152, %p153
      %p155 = scmp.le.s32.totalorder 1, %s11
      %p156 = scmp.lt.s32.totalorder %s11, 3
      %p157 = pnand %p155, %p156
      %p158 = pneg %p157
      // Predicated region
      $region9: #{tpu_custom_call.1} parent=5 // pred_check
        _
      $region10: #{tpu_custom_call.1} parent=5 // pred_check_branch
        %160 = sbr.rel (%p157) target = $region12
      $region11: #{tpu_custom_call.1} parent=5 // pred_region
        %s161 = ssub.s32 %s11, 1
        // Predicated region
        $region13: #{tpu_custom_call.1} parent=11 // pred_check
          %p162 = pneg %p58
        $region14: #{tpu_custom_call.1} parent=11 // pred_check_branch
          %164 = sbr.rel (%p162) target = $region16
        $region15: #{tpu_custom_call.1} parent=11 // pred_region
          _
        $region16: #{tpu_custom_call.1} parent=11 // pred_fallthru
          _
        // Predicated region
        $region17: #{tpu_custom_call.1} parent=11 // pred_check
          %p165 = pneg %p79
        $region18: #{tpu_custom_call.1} parent=11 // pred_check_branch
          %167 = sbr.rel (%p165) target = $region20
        $region19: #{tpu_custom_call.1} parent=11 // pred_region
          _
        $region20: #{tpu_custom_call.1} parent=11 // pred_fallthru
          _
        // Predicated region
        $region21: #{tpu_custom_call.1} parent=11 // pred_check
          %p168 = pneg %p100
        $region22: #{tpu_custom_call.1} parent=11 // pred_check_branch
          %170 = sbr.rel (%p168) target = $region24
        $region23: #{tpu_custom_call.1} parent=11 // pred_region
          _
        $region24: #{tpu_custom_call.1} parent=11 // pred_fallthru
          _
        // Predicated region
        $region25: #{tpu_custom_call.1} parent=11 // pred_check
          %p171 = pneg %p121
        $region26: #{tpu_custom_call.1} parent=11 // pred_check_branch
          %173 = sbr.rel (%p171) target = $region28
        $region27: #{tpu_custom_call.1} parent=11 // pred_region
          _
        $region28: #{tpu_custom_call.1} parent=11 // pred_fallthru
          _
      $region12: #{tpu_custom_call.1} parent=5 // pred_fallthru
        _
      %p174 = scmp.lt.s32.totalorder %s11, 2
      // Predicated region
      $region29: #{tpu_custom_call.1} parent=5 // pred_check
        %p175 = pneg %p174
      $region30: #{tpu_custom_call.1} parent=5 // pred_check_branch
        %177 = sbr.rel (%p175) target = $region32
      $region31: #{tpu_custom_call.1} parent=5 // pred_region
        // Predicated region
        $region33: #{tpu_custom_call.1} parent=31 // pred_check
          %p178 = pneg %p31
        $region34: #{tpu_custom_call.1} parent=31 // pred_check_branch
          %180 = sbr.rel (%p178) target = $region36
        $region35: #{tpu_custom_call.1} parent=31 // pred_region
          %s181 = smul.u32 5, %s11
          %s182 = ssub.s32 9, %s181
          %p183 = scmp.lt.s32.totalorder %s182, 5
          %s184 = scalar_select %p183, %s182, 5
          %s185 = smul.u32 8, %s184
          %p186 = scmp.lt.s32.totalorder %s181, 8
          %s187 = scalar_select %p186, %s181, 8
          %s188 = smul.addr %s187, 8
          %s189 = scalar_lea.vmem %s0, %s188
          %s190 = smul.u32 5, %s11
          %s191 = ssub.s32 9, %s190
          %p192 = scmp.lt.s32.totalorder %s191, 5
          %s193 = scalar_select %p192, %s191, 5
          %s194 = smul.u32 8, %s193
        $region36: #{tpu_custom_call.1} parent=31 // pred_fallthru
          _
      $region32: #{tpu_custom_call.1} parent=5 // pred_fallthru
        _
      %p195 = scmp.le.s32.totalorder 1, %s11
      %p196 = scmp.lt.s32.totalorder %s11, 3
      %p197 = pnand %p195, %p196
      %p198 = pneg %p197
      // Predicated region
      $region37: #{tpu_custom_call.1} parent=5 // pred_check
        _
      $region38: #{tpu_custom_call.1} parent=5 // pred_check_branch
        %200 = sbr.rel (%p197) target = $region40
      $region39: #{tpu_custom_call.1} parent=5 // pred_region
        %s201 = ssub.s32 %s11, 1
        %s202 = smul.u32 5, %s16
        %s203 = ssub.s32 9, %s202
        %p204 = scmp.lt.s32.totalorder %s203, 5
        %s205 = scalar_select %p204, %s203, 5
        %s206 = smul.u32 8, %s205
        %p207 = scmp.lt.s32.totalorder %s202, 8
        %s208 = scalar_select %p207, %s202, 8
        %s209 = smul.addr %s208, 8
        %s210 = scalar_lea.vmem %s0, %s209
        %p211 = pneg %p37
        %p212 = pneg %p34
        %p213 = pneg %p58
        %p214 = pneg %p55
        %p215 = pneg %p79
        %p216 = pneg %p76
        %p217 = pneg %p100
        %p218 = pneg %p97
        %p219 = pneg %p121
        %p220 = pneg %p118
        %p221 = pneg %p147
        %p222 = pneg %p144
        %s223 = sand.u32 %s134, 1
        %s224 = sand.u32 %s134, 1
        %s225 = smul.addr %s224, 40
        %s226 = scalar_lea.vmem [#allocation2], %s225
        %s227 = smul.u32 5, %s16
        %s228 = ssub.s32 9, %s227
        %p229 = scmp.lt.s32.totalorder %s228, 5
        %s230 = scalar_select %p229, %s228, 5
        %s231 = smul.u32 8, %s230
        %p232 = scmp.lt.s32.totalorder %s227, 8
        %s233 = scalar_select %p232, %s227, 8
        %s234 = smul.addr %s233, 8
        %s235 = scalar_lea.vmem %s0, %s234
        %s236 = smul.u32 5, %s16
        %s237 = ssub.s32 9, %s236
        %p238 = scmp.lt.s32.totalorder %s237, 5
        %s239 = scalar_select %p238, %s237, 5
        %s240 = smul.u32 8, %s239
        %s241 = smul.u32 5, %s16
        %s242 = ssub.s32 9, %s241
        %p243 = scmp.lt.s32.totalorder %s242, 5
        %s244 = scalar_select %p243, %s242, 5
        %s245 = smul.u32 8, %s244
        %v246 = vld [vmem:[%s235] sm:$0xff]
        %v247 = vld [vmem:[%s235 + $0x8] sm:$0xff]
        %v248 = vld [vmem:[%s235 + $0x10] sm:$0xff]
        %v249 = vld [vmem:[%s235 + $0x18] sm:$0xff]
        %v250 = vld [vmem:[%s235 + $0x20] sm:$0xff]
        %v251 = vld [vmem:[%s1] sm:$0xff]
        %v252 = vld [vmem:[%s2] sm:$0x1]
        %v254 = vperm.slane %v252, 0
        %vm256 = vcmask 64512
        %v258 = vsel %vm256, %v246, 0
        %v261 = vsel %vm256, %v247, 0
        %v264 = vsel %vm256, %v248, 0
        %v267 = vsel %vm256, %v249, 0
        %v270 = vsel %vm256, %v250, 0
        %272 = vmatpush.msra.mxu0 0.0
        %273 = vmatpush.msra.mxu0 0.0
        %274 = vmatpush.msra.mxu0 0.0
        %275 = vmatpush.msra.mxu0 0.0
        %276 = vmatpush.msra.mxu0 0.0
        %277 = vmatpush.msra.mxu0 0.0
        %278 = vmatpush.msra.mxu0 0.0
        %279 = vmatpush.msra.mxu0 0.0
        %280 = vmatpush.msra.mxu0 0.0
        %281 = vmatpush.msra.mxu0 0.0
        %282 = vmatpush.msra.mxu0 0.0
        %283 = vmatpush.msra.mxu0 0.0
        %284 = vmatpush.msra.mxu0 0.0
        %285 = vmatpush.msra.mxu0 0.0
        %286 = vmatpush.msra.mxu0 0.0
        %287 = vmatpush.msra.mxu0 %v251
        %288 = vmatmul.f32.gmra.mxu0 %v258
        %v289 = vpop.f32.mrf.mxu0
        %v290 = vadd.f32 %v254, %v289
        %291 = vmatmul.f32.gmra.mxu0 %v261
        %v292 = vpop.f32.mrf.mxu0
        %v293 = vadd.f32 %v254, %v292
        %294 = vmatmul.f32.gmra.mxu0 %v264
        %v295 = vpop.f32.mrf.mxu0
        %v296 = vadd.f32 %v254, %v295
        %297 = vmatmul.f32.gmra.mxu0 %v267
        %v298 = vpop.f32.mrf.mxu0
        %v299 = vadd.f32 %v254, %v298
        %300 = vmatmul.f32.gmra.mxu0 %v270
        %v301 = vpop.f32.mrf.mxu0
        %v302 = vadd.f32 %v254, %v301
        %303 = vdwg.mxu0
        %v304 = vmax.f32 %v290, 0.0
        %v305 = vmax.f32 %v293, 0.0
        %v306 = vmax.f32 %v296, 0.0
        %v307 = vmax.f32 %v299, 0.0
        %v308 = vmax.f32 %v302, 0.0
        %v309 = vld [vmem:[%s3] sm:$0xff]
        %v310 = vld [vmem:[%s3 + $0x8] sm:$0xff]
        %v311 = vld [vmem:[%s3 + $0x10] sm:$0xff]
        %v312 = vld [vmem:[%s3 + $0x18] sm:$0xff]
        %v313 = vld [vmem:[%s4] sm:$0x1]
        %v315 = vperm.slane %v313, 0
        %vm317 = vcmask 261120
        %v319 = vsel %vm317, %v304, 0
        %v322 = vsel %vm317, %v305, 0
        %v325 = vsel %vm317, %v306, 0
        %v328 = vsel %vm317, %v307, 0
        %v331 = vsel %vm317, %v308, 0
        %333 = vmatpush.msra.mxu0 0.0
        %334 = vmatpush.msra.mxu0 0.0
        %335 = vmatpush.msra.mxu0 0.0
        %336 = vmatpush.msra.mxu0 0.0
        %337 = vmatpush.msra.mxu0 0.0
        %338 = vmatpush.msra.mxu0 0.0
        %339 = vmatpush.msra.mxu0 0.0
        %340 = vmatpush.msra.mxu0 0.0
        %341 = vmatpush.msra.mxu0 0.0
        %342 = vmatpush.msra.mxu0 0.0
        %343 = vmatpush.msra.mxu0 0.0
        %344 = vmatpush.msra.mxu0 0.0
        %345 = vmatpush.msra.mxu0 %v312
        %346 = vmatpush.msra.mxu0 %v311
        %347 = vmatpush.msra.mxu0 %v310
        %348 = vmatpush.msra.mxu0 %v309
        %349 = vmatmul.f32.gmra.mxu0 %v319
        %v350 = vpop.f32.mrf.mxu0
        %v351 = vadd.f32 %v315, %v350
        %352 = vmatmul.f32.gmra.mxu0 %v322
        %v353 = vpop.f32.mrf.mxu0
        %v354 = vadd.f32 %v315, %v353
        %355 = vmatmul.f32.gmra.mxu0 %v325
        %v356 = vpop.f32.mrf.mxu0
        %v357 = vadd.f32 %v315, %v356
        %358 = vmatmul.f32.gmra.mxu0 %v328
        %v359 = vpop.f32.mrf.mxu0
        %v360 = vadd.f32 %v315, %v359
        %361 = vmatmul.f32.gmra.mxu0 %v331
        %v362 = vpop.f32.mrf.mxu0
        %v363 = vadd.f32 %v315, %v362
        %364 = vdwg.mxu0
        %vm365 = vcmask 31744
        %366 = vst.msk [vmem:[%s226] sm:$0xff] %vm365, %v351
        %367 = vst.msk [vmem:[%s226 + $0x8] sm:$0xff] %vm365, %v354
        %368 = vst.msk [vmem:[%s226 + $0x10] sm:$0xff] %vm365, %v357
        %369 = vst.msk [vmem:[%s226 + $0x18] sm:$0xff] %vm365, %v360
        %370 = vst.msk [vmem:[%s226 + $0x20] sm:$0xff] %vm365, %v363
        %s371 = sand.u32 %s134, 1
        %s372 = sand.u32 %s134, 1
        %s373 = smul.addr %s372, 40
        %s374 = scalar_lea.vmem [#allocation2], %s373
        // Predicated region
        $region41: #{tpu_custom_call.1} parent=39 // pred_check
          %p375 = pneg %p144
        $region42: #{tpu_custom_call.1} parent=39 // pred_check_branch
          %377 = sbr.rel (%p375) target = $region44
        $region43: #{tpu_custom_call.1} parent=39 // pred_region
          %s378 = smul.u32 5, %s16
          %s379 = ssub.s32 9, %s378
          %p380 = scmp.lt.s32.totalorder %s379, 5
          %s381 = scalar_select %p380, %s379, 5
          %s382 = smul.u32 8, %s381
          %p383 = scmp.ne.s32.totalorder 0, %s382
          %s384 = smul.addr %s378, 8
          %s385 = scalar_lea.vmem %s5, %s384
          // Predicated region
          $region45: #{tpu_custom_call.1} parent=43 // pred_check
            %p386 = pneg %p383
          $region46: #{tpu_custom_call.1} parent=43 // pred_check_branch
            %388 = sbr.rel (%p386) target = $region48
          $region47: #{tpu_custom_call.1} parent=43 // pred_region
            // Predicated region
            $region49: #{tpu_custom_call.1} parent=47 // pred_check
              _
            $region50: #{tpu_custom_call.1} parent=47 // pred_check_branch
              %390 = sbr.rel (0) target = $region52
            $region51: #{tpu_custom_call.1} parent=47 // pred_region
              // Predicated region
              $region71: #{tpu_custom_call.1} parent=51 // pred_check
                _
              $region72: #{tpu_custom_call.1} parent=51 // pred_check_branch
                %449 = sbr.rel (0) target = $region74
              $region73: #{tpu_custom_call.1} parent=51 // pred_region
                %s450 = sdiv.u32.pop %s381, 5
                %s451 = srem.u32.pop %s381, 5
                // While loop
                $region75: #{tpu_custom_call.1} parent=73 // loop_pre_header
                  _
                $region76: #{tpu_custom_call.1} parent=73 // loop_header
                  %s453 = sphi 0, %s455
                  %p454 = scmp.ge.s32.totalorder %s453, %s450
                  %s458 = sphi 0, %s473
                  %s459 = sphi %s374, %s476
                  %s460 = sphi %s385, %s477
                $region77: #{tpu_custom_call.1} parent=73 // loop_header_branch
                  %457 = sbr.rel (%p454) target = $region81
                $region78: #{tpu_custom_call.1} parent=73 // loop_body
                  %v461 = vld [vmem:[%s459] sm:$0xff]
                  %462 = vst [vmem:[%s460] sm:$0xff] %v461
                  %v463 = vld [vmem:[%s459 + $0x8] sm:$0xff]
                  %464 = vst [vmem:[%s460 + $0x8] sm:$0xff] %v463
                  %v465 = vld [vmem:[%s459 + $0x10] sm:$0xff]
                  %466 = vst [vmem:[%s460 + $0x10] sm:$0xff] %v465
                  %v467 = vld [vmem:[%s459 + $0x18] sm:$0xff]
                  %468 = vst [vmem:[%s460 + $0x18] sm:$0xff] %v467
                  %v469 = vld [vmem:[%s459 + $0x20] sm:$0xff]
                  %470 = vst [vmem:[%s460 + $0x20] sm:$0xff] %v469
                  %s471 = sadd.s32 1, %s458
                  %p472 = scmp.ge.s32.totalorder %s471, %s450
                  %s473 = scalar_select %p472, 0, %s471
                  %s474 = smul.u32 %s473, 40
                  %s475 = smul.u32 %s473, 40
                  %s476 = scalar_lea.vmem %s374, %s474 [#allocation2]
                  %s477 = scalar_lea.vmem %s385, %s475
                $region79: #{tpu_custom_call.1} parent=73 // loop_footer
                  %s455 = sadd.s32 %s453, 1
                $region80: #{tpu_custom_call.1} parent=73 // loop_footer_branch
                  %452 = sbr.rel target = $region76
                $region81: #{tpu_custom_call.1} parent=73 // loop_exit
                  _
                %s478 = sdiv.u32.pop %s381, 5
                %s479 = srem.u32.pop %s381, 5
                %s480 = smul.u32 %s478, 5
                %s481 = smul.u32 8, %s480
                %s482 = scalar_lea.vmem %s374, %s481 [#allocation2]
                %s483 = smul.u32 8, %s480
                %s484 = scalar_lea.vmem %s385, %s483
                // While loop
                $region82: #{tpu_custom_call.1} parent=73 // loop_pre_header
                  _
                $region83: #{tpu_custom_call.1} parent=73 // loop_header
                  %s486 = sphi 0, %s488
                  %p487 = scmp.ge.s32.totalorder %s486, %s479
                  %s491 = sphi 0, %s498
                  %s492 = sphi %s482, %s501
                  %s493 = sphi %s484, %s502
                $region84: #{tpu_custom_call.1} parent=73 // loop_header_branch
                  %490 = sbr.rel (%p487) target = $region88
                $region85: #{tpu_custom_call.1} parent=73 // loop_body
                  %v494 = vld [vmem:[%s492] sm:$0xff]
                  %495 = vst [vmem:[%s493] sm:$0xff] %v494
                  %s496 = sadd.s32 1, %s491
                  %p497 = scmp.ge.s32.totalorder %s496, %s479
                  %s498 = scalar_select %p497, 0, %s496
                  %s499 = smul.u32 %s498, 8
                  %s500 = smul.u32 %s498, 8
                  %s501 = scalar_lea.vmem %s482, %s499 [#allocation2]
                  %s502 = scalar_lea.vmem %s484, %s500
                $region86: #{tpu_custom_call.1} parent=73 // loop_footer
                  %s488 = sadd.s32 %s486, 1
                $region87: #{tpu_custom_call.1} parent=73 // loop_footer_branch
                  %485 = sbr.rel target = $region83
                $region88: #{tpu_custom_call.1} parent=73 // loop_exit
                  _
              $region74: #{tpu_custom_call.1} parent=51 // pred_fallthru
                _
              // Predicated region
              $region89: #{tpu_custom_call.1} parent=51 // pred_check
                _
              $region90: #{tpu_custom_call.1} parent=51 // pred_check_branch
                %504 = sbr.rel target = $region92
              $region91: #{tpu_custom_call.1} parent=51 // pred_region
                _
              $region92: #{tpu_custom_call.1} parent=51 // pred_fallthru
                _
            $region52: #{tpu_custom_call.1} parent=47 // pred_fallthru
              _
            // Predicated region
            $region53: #{tpu_custom_call.1} parent=47 // pred_check
              _
            $region54: #{tpu_custom_call.1} parent=47 // pred_check_branch
              %392 = sbr.rel target = $region56
            $region55: #{tpu_custom_call.1} parent=47 // pred_region
              %s394 = ssub.s32 256, 1
              %s395 = sdiv.u32.pop %s381, 5
              %s396 = srem.u32.pop %s381, 5
              // While loop
              $region57: #{tpu_custom_call.1} parent=55 // loop_pre_header
                _
              $region58: #{tpu_custom_call.1} parent=55 // loop_header
                %s398 = sphi 0, %s400
                %p399 = scmp.ge.s32.totalorder %s398, %s395
                %s403 = sphi 0, %s418
                %s404 = sphi %s374, %s421
                %s405 = sphi %s385, %s422
              $region59: #{tpu_custom_call.1} parent=55 // loop_header_branch
                %402 = sbr.rel (%p399) target = $region63
              $region60: #{tpu_custom_call.1} parent=55 // loop_body
                %v406 = vld [vmem:[%s404] sm:%s394]
                %407 = vst [vmem:[%s405] sm:%s394] %v406
                %v408 = vld [vmem:[%s404 + $0x8] sm:%s394]
                %409 = vst [vmem:[%s405 + $0x8] sm:%s394] %v408
                %v410 = vld [vmem:[%s404 + $0x10] sm:%s394]
                %411 = vst [vmem:[%s405 + $0x10] sm:%s394] %v410
                %v412 = vld [vmem:[%s404 + $0x18] sm:%s394]
                %413 = vst [vmem:[%s405 + $0x18] sm:%s394] %v412
                %v414 = vld [vmem:[%s404 + $0x20] sm:%s394]
                %415 = vst [vmem:[%s405 + $0x20] sm:%s394] %v414
                %s416 = sadd.s32 1, %s403
                %p417 = scmp.ge.s32.totalorder %s416, %s395
                %s418 = scalar_select %p417, 0, %s416
                %s419 = smul.u32 %s418, 40
                %s420 = smul.u32 %s418, 40
                %s421 = scalar_lea.vmem %s374, %s419 [#allocation2]
                %s422 = scalar_lea.vmem %s385, %s420
              $region61: #{tpu_custom_call.1} parent=55 // loop_footer
                %s400 = sadd.s32 %s398, 1
              $region62: #{tpu_custom_call.1} parent=55 // loop_footer_branch
                %397 = sbr.rel target = $region58
              $region63: #{tpu_custom_call.1} parent=55 // loop_exit
                _
              %s423 = sdiv.u32.pop %s381, 5
              %s424 = srem.u32.pop %s381, 5
              %s425 = smul.u32 %s423, 5
              %s426 = smul.u32 8, %s425
              %s427 = scalar_lea.vmem %s374, %s426 [#allocation2]
              %s428 = smul.u32 8, %s425
              %s429 = scalar_lea.vmem %s385, %s428
              // While loop
              $region64: #{tpu_custom_call.1} parent=55 // loop_pre_header
                _
              $region65: #{tpu_custom_call.1} parent=55 // loop_header
                %s431 = sphi 0, %s433
                %p432 = scmp.ge.s32.totalorder %s431, %s424
                %s436 = sphi 0, %s443
                %s437 = sphi %s427, %s446
                %s438 = sphi %s429, %s447
              $region66: #{tpu_custom_call.1} parent=55 // loop_header_branch
                %435 = sbr.rel (%p432) target = $region70
              $region67: #{tpu_custom_call.1} parent=55 // loop_body
                %v439 = vld [vmem:[%s437] sm:%s394]
                %440 = vst [vmem:[%s438] sm:%s394] %v439
                %s441 = sadd.s32 1, %s436
                %p442 = scmp.ge.s32.totalorder %s441, %s424
                %s443 = scalar_select %p442, 0, %s441
                %s444 = smul.u32 %s443, 8
                %s445 = smul.u32 %s443, 8
                %s446 = scalar_lea.vmem %s427, %s444 [#allocation2]
                %s447 = scalar_lea.vmem %s429, %s445
              $region68: #{tpu_custom_call.1} parent=55 // loop_footer
                %s433 = sadd.s32 %s431, 1
              $region69: #{tpu_custom_call.1} parent=55 // loop_footer_branch
                %430 = sbr.rel target = $region65
              $region70: #{tpu_custom_call.1} parent=55 // loop_exit
                _
            $region56: #{tpu_custom_call.1} parent=47 // pred_fallthru
              _
          $region48: #{tpu_custom_call.1} parent=43 // pred_fallthru
            _
          %505 = vnop
        $region44: #{tpu_custom_call.1} parent=39 // pred_fallthru
          _
      $region40: #{tpu_custom_call.1} parent=5 // pred_fallthru
        _
      %p506 = scmp.le.s32.totalorder 2, %s11
      // Predicated region
      $region93: #{tpu_custom_call.1} parent=5 // pred_check
        %p507 = pneg %p506
      $region94: #{tpu_custom_call.1} parent=5 // pred_check_branch
        %509 = sbr.rel (%p507) target = $region96
      $region95: #{tpu_custom_call.1} parent=5 // pred_region
        %s510 = ssub.s32 %s11, 2
        // Predicated region
        $region97: #{tpu_custom_call.1} parent=95 // pred_check
          %p511 = pneg %p150
        $region98: #{tpu_custom_call.1} parent=95 // pred_check_branch
          %513 = sbr.rel (%p511) target = $region100
        $region99: #{tpu_custom_call.1} parent=95 // pred_region
          %s514 = sand.u32 %s135, 1
          %s515 = sand.u32 %s135, 1
          %s516 = smul.addr %s515, 40
          %s517 = scalar_lea.vmem [#allocation2], %s516
        $region100: #{tpu_custom_call.1} parent=95 // pred_fallthru
          _
      $region96: #{tpu_custom_call.1} parent=5 // pred_fallthru
        _
    $region6: #{tpu_custom_call.1} parent=1 // loop_footer
      %s15 = sadd.s32 1, %s11
    $region7: #{tpu_custom_call.1} parent=1 // loop_footer_branch
      %10 = sbr.rel target = $region3
    $region8: #{tpu_custom_call.1} parent=1 // loop_exit
      _

</llo_original>
